<compile_context>
chip_gen: v6e
topology: v6e:2x2x1
jax: 0.10.0
libtpu: 0.0.40
codegen_flags: <defaults>
</compile_context>

<pallas_src>
import functools

import jax
import jax.numpy as jnp
from jax import lax
from jax.experimental import pallas as pl
from jax.experimental.pallas import tpu as pltpu

LOG_STD_MAX = 2.0
LOG_STD_MIN = -5.0
_LS_SCALE = 0.5 * (LOG_STD_MAX - LOG_STD_MIN)   # 3.5
_LS_SHIFT = LOG_STD_MIN + _LS_SCALE             # -1.5


def _round_up(n, m):
    return ((n + m - 1) // m) * m


def _actor_kernel(x_ref, w1_ref, b1_ref, w2_ref, b2_ref, wh_ref, bh_ref,
                  out_ref, *, action_dim):
    # fc1 + ReLU  (bf16 MXU inputs, f32 accumulate, f32 elementwise)
    h1 = jnp.dot(x_ref[...].astype(jnp.bfloat16), w1_ref[...],
                 preferred_element_type=jnp.float32)
    h1 = jnp.maximum(h1 + b1_ref[...], 0.0)
    # fc2 + ReLU
    h2 = jnp.dot(h1.astype(jnp.bfloat16), w2_ref[...],
                 preferred_element_type=jnp.float32)
    h2 = jnp.maximum(h2 + b2_ref[...], 0.0)
    # fused heads: columns = [mean | log_std(raw) | zero-pad to sublane multiple]
    heads = jnp.dot(h2.astype(jnp.bfloat16), wh_ref[...],
                    preferred_element_type=jnp.float32) + bh_ref[...]
    # tanh-squash only the log_std (and throwaway pad) columns; EUP tanh + one FMA
    col = lax.broadcasted_iota(jnp.int32, heads.shape, 1)
    squashed = _LS_SCALE * jnp.tanh(heads) + _LS_SHIFT
    out_ref[...] = jnp.where(col >= action_dim, squashed, heads).astype(out_ref.dtype)


def _choose_batch_tile(batch):
    """Batch tile: big tiles to amortize per-grid-step overhead, but keep >= 2
    tiles when batch > 128 so ("parallel",) can use both TensorCores on v7x."""
    if batch <= 128:
        return _round_up(max(batch, 8), 8)          # single (small) tile
    tiles128 = _round_up(batch, 128) // 128
    return min(512, max(128, (tiles128 // 2) * 128))


@functools.partial(jax.jit, static_argnames=("action_dim",))
def actor_forward(x, w1, b1, w2, b2, wh, bh, *, action_dim):
    """Fused Actor forward. Weights stay VMEM-resident across batch tiles;
    only x and the narrow [batch, head_cols] output slab stream HBM<->VMEM."""
    batch, feat_dim = x.shape
    expanse = w1.shape[1]
    head_cols = wh.shape[1]                         # round_up(2*action_dim, 8)
    assert 2 * action_dim <= head_cols

    tb = _choose_batch_tile(batch)
    padded = _round_up(batch, tb)
    if padded != batch:
        x = jnp.pad(x, ((0, padded - batch), (0, 0)))
    grid = (padded // tb,)

    cost = pl.CostEstimate(
        flops=2 * padded * (feat_dim * expanse + expanse * expanse
                            + expanse * head_cols),
        transcendentals=padded * head_cols,
        bytes_accessed=(padded * feat_dim * 4          # x (f32)
                        + padded * head_cols * 4       # out (f32)
                        + (w1.size + w2.size + wh.size) * 2   # bf16 weights
                        + (b1.size + b2.size + bh.size) * 4), # f32 biases
    )

    kernel = functools.partial(_actor_kernel, action_dim=action_dim)
    out = pl.pallas_call(
        kernel,
        out_shape=jax.ShapeDtypeStruct((padded, head_cols), jnp.float32),
        grid_spec=pltpu.PrefetchScalarGridSpec(
            num_scalar_prefetch=0,
            grid=grid,
            in_specs=[
                pl.BlockSpec((tb, feat_dim), lambda i: (i, 0)),          # x tile streams
                pl.BlockSpec((feat_dim, expanse), lambda i: (0, 0)),     # w1 resident
                pl.BlockSpec((1, expanse), lambda i: (0, 0)),            # b1 resident
                pl.BlockSpec((expanse, expanse), lambda i: (0, 0)),      # w2 resident
                pl.BlockSpec((1, expanse), lambda i: (0, 0)),            # b2 resident
                pl.BlockSpec((expanse, head_cols), lambda i: (0, 0)),    # fused heads W
                pl.BlockSpec((1, head_cols), lambda i: (0, 0)),          # fused heads b
            ],
            out_specs=pl.BlockSpec((tb, head_cols), lambda i: (i, 0)),
        ),
        compiler_params=pltpu.CompilerParams(
            dimension_semantics=("parallel",),       # batch tiles across v7x's 2 TCs
            vmem_limit_bytes=32 * 1024 * 1024,       # explicit; safe on v5e/v6e/v7x
        ),
        cost_estimate=cost,
    )(x, w1, b1, w2, b2, wh, bh)

    mean = out[:batch, :action_dim]
    log_std = out[:batch, action_dim:2 * action_dim]
    return mean, log_std


def init_actor_params(key, feat_dim, expanse_dim, action_dim):
    """nn.Linear-style uniform(+/- 1/sqrt(fan_in)) init.
    Weights as [in, out] (transposed vs. PyTorch), biases as [1, out]."""
    def linear(k, fan_in, fan_out):
        kw, kb = jax.random.split(k)
        bound = 1.0 / jnp.sqrt(fan_in)
        w = jax.random.uniform(kw, (fan_in, fan_out), jnp.float32, -bound, bound)
        b = jax.random.uniform(kb, (1, fan_out), jnp.float32, -bound, bound)
        return w, b

    k1, k2, k3, k4 = jax.random.split(key, 4)
    w1, b1 = linear(k1, feat_dim, expanse_dim)
    w2, b2 = linear(k2, expanse_dim, expanse_dim)
    wm, bm = linear(k3, expanse_dim, action_dim)
    wl, bl = linear(k4, expanse_dim, action_dim)
    return (w1, b1, w2, b2, wm, bm, wl, bl)


def prepare_kernel_params(params):
    """Fuse the two heads into one narrow [E, round_up(2*action_dim, 8)] matrix
    (zero-padded) and cast weights to bf16 (biases stay f32)."""
    w1, b1, w2, b2, wm, bm, wl, bl = params
    action_dim = wm.shape[1]
    head_cols = _round_up(2 * action_dim, 8)
    wh = jnp.concatenate([wm, wl], axis=1)
    bh = jnp.concatenate([bm, bl], axis=1)
    pad = head_cols - wh.shape[1]
    wh = jnp.pad(wh, ((0, 0), (0, pad)))
    bh = jnp.pad(bh, ((0, 0), (0, pad)))
    return (w1.astype(jnp.bfloat16), b1.astype(jnp.float32),
            w2.astype(jnp.bfloat16), b2.astype(jnp.float32),
            wh.astype(jnp.bfloat16), bh.astype(jnp.float32)), action_dim


def actor_forward_ref(x, params):
    """Pure-JAX reference with identical numerics (bf16 MXU inputs, f32 accum)."""
    w1, b1, w2, b2, wm, bm, wl, bl = params

    def dot(a, w):
        return jnp.dot(a.astype(jnp.bfloat16), w.astype(jnp.bfloat16),
                       preferred_element_type=jnp.float32)

    h = jnp.maximum(dot(x, w1) + b1, 0.0)
    h = jnp.maximum(dot(h, w2) + b2, 0.0)
    mean = dot(h, wm) + bm
    ls = _LS_SCALE * jnp.tanh(dot(h, wl) + bl) + _LS_SHIFT
    return mean, ls


if __name__ == "__main__":
    batch = 8
    feat_dim = 32
    expanse_dim = 256
    action_dim = 4   # np.prod(env.action_space.shape)

    key = jax.random.PRNGKey(0)
    kx, kp = jax.random.split(key)
    x = jax.random.normal(kx, (batch, feat_dim), jnp.float32)
    params = init_actor_params(kp, feat_dim, expanse_dim, action_dim)
    kparams, adim = prepare_kernel_params(params)

    mean, log_std = actor_forward(x, *kparams, action_dim=adim)
    jax.block_until_ready((mean, log_std))

    mean_ref, log_std_ref = actor_forward_ref(x, params)
    assert mean.shape == (batch, action_dim) and log_std.shape == (batch, action_dim)
    assert jnp.allclose(mean, mean_ref, atol=1e-3, rtol=1e-3)
    assert jnp.allclose(log_std, log_std_ref, atol=1e-3, rtol=1e-3)
    assert bool(jnp.all(log_std >= LOG_STD_MIN)) and bool(jnp.all(log_std <= LOG_STD_MAX))

    # TODO(synk): get_action's Normal.rsample / log_prob path is stochastic host-side
    # glue and is intentionally left outside the kernel (only forward() is required).
    print("KERNEL_OK")
</pallas_src>

<mosaic_0001>
module attributes {stable_mosaic.version = 11 : i64} {
  func.func @_actor_kernel(%arg0: i32, %arg1: memref<8x32xf32, #tpu.memory_space<vmem>>, %arg2: memref<32x256xbf16, #tpu.memory_space<vmem>>, %arg3: memref<1x256xf32, #tpu.memory_space<vmem>>, %arg4: memref<256x256xbf16, #tpu.memory_space<vmem>>, %arg5: memref<1x256xf32, #tpu.memory_space<vmem>>, %arg6: memref<256x8xbf16, #tpu.memory_space<vmem>>, %arg7: memref<1x8xf32, #tpu.memory_space<vmem>>, %arg8: memref<8x8xf32, #tpu.memory_space<vmem>>) attributes {dimension_semantics = [#tpu.dimension_semantics<parallel>], iteration_bounds = array<i64: 1>, scalar_prefetch = 0 : i64, scratch_operands = 0 : i64, tpu.core_type = #tpu.core_type<tc>, window_params = [{transform_indices = @transform_0, window_bounds = array<i64: 8, 32>}, {pipeline_mode = #tpu.pipeline_mode<synchronous>, transform_indices = @transform_1, window_bounds = array<i64: 32, 256>}, {pipeline_mode = #tpu.pipeline_mode<synchronous>, transform_indices = @transform_2, window_bounds = array<i64: 1, 256>}, {pipeline_mode = #tpu.pipeline_mode<synchronous>, transform_indices = @transform_3, window_bounds = array<i64: 256, 256>}, {pipeline_mode = #tpu.pipeline_mode<synchronous>, transform_indices = @transform_4, window_bounds = array<i64: 1, 256>}, {pipeline_mode = #tpu.pipeline_mode<synchronous>, transform_indices = @transform_5, window_bounds = array<i64: 256, 8>}, {pipeline_mode = #tpu.pipeline_mode<synchronous>, transform_indices = @transform_6, window_bounds = array<i64: 1, 8>}, {transform_indices = @transform_7, window_bounds = array<i64: 8, 8>}]} {
    %c0 = arith.constant 0 : index
    %c0_0 = arith.constant 0 : index
    %0 = vector.load %arg1[%c0, %c0_0] : memref<8x32xf32, #tpu.memory_space<vmem>>, vector<8x32xf32>
    %1 = arith.truncf %0 : vector<8x32xf32> to vector<8x32xbf16>
    %c0_1 = arith.constant 0 : index
    %c0_2 = arith.constant 0 : index
    %2 = vector.load %arg2[%c0_1, %c0_2] : memref<32x256xbf16, #tpu.memory_space<vmem>>, vector<32x256xbf16>
    %cst = arith.constant dense<0.000000e+00> : vector<8x256xf32>
    %3 = tpu.matmul %1, %2, %cst {dimension_numbers = #tpu.dot_dimension_numbers<[1], [0], [0], [1], [0, 0, 1, 1], [], []>} : vector<8x32xbf16>, vector<32x256xbf16>, vector<8x256xf32> -> vector<8x256xf32>
    %c0_3 = arith.constant 0 : index
    %c0_4 = arith.constant 0 : index
    %4 = vector.load %arg3[%c0_3, %c0_4] : memref<1x256xf32, #tpu.memory_space<vmem>>, vector<1x256xf32>
    %5 = vector.broadcast %4 : vector<1x256xf32> to vector<8x256xf32>
    %6 = arith.addf %3, %5 : vector<8x256xf32>
    %cst_5 = arith.constant 0.000000e+00 : f32
    %7 = vector.broadcast %cst_5 : f32 to vector<8x256xf32>
    %8 = arith.maximumf %6, %7 : vector<8x256xf32>
    %9 = arith.truncf %8 : vector<8x256xf32> to vector<8x256xbf16>
    %c0_6 = arith.constant 0 : index
    %c0_7 = arith.constant 0 : index
    %10 = vector.load %arg4[%c0_6, %c0_7] : memref<256x256xbf16, #tpu.memory_space<vmem>>, vector<256x256xbf16>
    %cst_8 = arith.constant dense<0.000000e+00> : vector<8x256xf32>
    %11 = tpu.matmul %9, %10, %cst_8 {dimension_numbers = #tpu.dot_dimension_numbers<[1], [0], [0], [1], [0, 0, 1, 1], [], []>} : vector<8x256xbf16>, vector<256x256xbf16>, vector<8x256xf32> -> vector<8x256xf32>
    %c0_9 = arith.constant 0 : index
    %c0_10 = arith.constant 0 : index
    %12 = vector.load %arg5[%c0_9, %c0_10] : memref<1x256xf32, #tpu.memory_space<vmem>>, vector<1x256xf32>
    %13 = vector.broadcast %12 : vector<1x256xf32> to vector<8x256xf32>
    %14 = arith.addf %11, %13 : vector<8x256xf32>
    %cst_11 = arith.constant 0.000000e+00 : f32
    %15 = vector.broadcast %cst_11 : f32 to vector<8x256xf32>
    %16 = arith.maximumf %14, %15 : vector<8x256xf32>
    %17 = arith.truncf %16 : vector<8x256xf32> to vector<8x256xbf16>
    %c0_12 = arith.constant 0 : index
    %c0_13 = arith.constant 0 : index
    %18 = vector.load %arg6[%c0_12, %c0_13] : memref<256x8xbf16, #tpu.memory_space<vmem>>, vector<256x8xbf16>
    %cst_14 = arith.constant dense<0.000000e+00> : vector<8x8xf32>
    %19 = tpu.matmul %17, %18, %cst_14 {dimension_numbers = #tpu.dot_dimension_numbers<[1], [0], [0], [1], [0, 0, 1, 1], [], []>} : vector<8x256xbf16>, vector<256x8xbf16>, vector<8x8xf32> -> vector<8x8xf32>
    %c0_15 = arith.constant 0 : index
    %c0_16 = arith.constant 0 : index
    %20 = vector.load %arg7[%c0_15, %c0_16] : memref<1x8xf32, #tpu.memory_space<vmem>>, vector<1x8xf32>
    %21 = vector.broadcast %20 : vector<1x8xf32> to vector<8x8xf32>
    %22 = arith.addf %19, %21 : vector<8x8xf32>
    %23 = tpu.iota {dimensions = array<i32: 1>} : vector<8x8xi32>
    %24 = math.tanh %22 : vector<8x8xf32>
    %cst_17 = arith.constant 3.500000e+00 : f32
    %25 = vector.broadcast %cst_17 : f32 to vector<8x8xf32>
    %26 = arith.mulf %25, %24 : vector<8x8xf32>
    %cst_18 = arith.constant -1.500000e+00 : f32
    %27 = vector.broadcast %cst_18 : f32 to vector<8x8xf32>
    %28 = arith.addf %26, %27 : vector<8x8xf32>
    %c4_i32 = arith.constant 4 : i32
    %29 = vector.broadcast %c4_i32 : i32 to vector<8x8xi32>
    %30 = arith.cmpi sge, %23, %29 : vector<8x8xi32>
    %31 = arith.select %30, %28, %22 : vector<8x8xi1>, vector<8x8xf32>
    %c0_19 = arith.constant 0 : index
    %c0_20 = arith.constant 0 : index
    %32 = vector.load %arg8[%c0_19, %c0_20] : memref<8x8xf32, #tpu.memory_space<vmem>>, vector<8x8xf32>
    tpu.vector_store %arg8[%c0_19, %c0_20], %31 {strides = array<i32>} : memref<8x8xf32, #tpu.memory_space<vmem>>, vector<8x8xf32>,
    return
  }
  func.func @transform_0(%arg0: i32) -> (i32, i32) {
    %c0_i32 = arith.constant 0 : i32
    %c0_i32_0 = arith.constant 0 : i32
    return %arg0, %c0_i32 : i32, i32
  }
  func.func @transform_1(%arg0: i32) -> (i32, i32) {
    %c0_i32 = arith.constant 0 : i32
    %c0_i32_0 = arith.constant 0 : i32
    %c0_i32_1 = arith.constant 0 : i32
    return %c0_i32, %c0_i32_0 : i32, i32
  }
  func.func @transform_2(%arg0: i32) -> (i32, i32) {
    %c0_i32 = arith.constant 0 : i32
    %c0_i32_0 = arith.constant 0 : i32
    %c0_i32_1 = arith.constant 0 : i32
    return %c0_i32, %c0_i32_0 : i32, i32
  }
  func.func @transform_3(%arg0: i32) -> (i32, i32) {
    %c0_i32 = arith.constant 0 : i32
    %c0_i32_0 = arith.constant 0 : i32
    %c0_i32_1 = arith.constant 0 : i32
    return %c0_i32, %c0_i32_0 : i32, i32
  }
  func.func @transform_4(%arg0: i32) -> (i32, i32) {
    %c0_i32 = arith.constant 0 : i32
    %c0_i32_0 = arith.constant 0 : i32
    %c0_i32_1 = arith.constant 0 : i32
    return %c0_i32, %c0_i32_0 : i32, i32
  }
  func.func @transform_5(%arg0: i32) -> (i32, i32) {
    %c0_i32 = arith.constant 0 : i32
    %c0_i32_0 = arith.constant 0 : i32
    %c0_i32_1 = arith.constant 0 : i32
    return %c0_i32, %c0_i32_0 : i32, i32
  }
  func.func @transform_6(%arg0: i32) -> (i32, i32) {
    %c0_i32 = arith.constant 0 : i32
    %c0_i32_0 = arith.constant 0 : i32
    %c0_i32_1 = arith.constant 0 : i32
    return %c0_i32, %c0_i32_0 : i32, i32
  }
  func.func @transform_7(%arg0: i32) -> (i32, i32) {
    %c0_i32 = arith.constant 0 : i32
    %c0_i32_0 = arith.constant 0 : i32
    return %arg0, %c0_i32 : i32, i32
  }
}

</mosaic_0001>

<llo_original>
// kernel: actor_forward.1
$region0: #{actor_forward.1}
  #allocation0 [shape = 'u32[]', space=smem, size = 0x4, offset = 0x4, fixed_abs, tag = 'smem constant byte address 0x4 - core index']
  #allocation1 [shape = 'u32[144,128]{1,0:T(1,128)}', space=vmem, size = 0x12000, scoped, tag = 'internal scratch']
  %s0 = inlined_call_operand.vmem [shape: f32[8,32], index: 0, kind: input, shape index: {}]
  %s1 = inlined_call_operand.vmem [shape: bf16[32,256], index: 1, kind: input, shape index: {}]
  %s2 = inlined_call_operand.vmem [shape: f32[1,256], index: 2, kind: input, shape index: {}]
  %s3 = inlined_call_operand.hbm [shape: bf16[256,256], index: 3, kind: input, shape index: {}]
  %s4 = inlined_call_operand.vmem [shape: f32[1,256], index: 4, kind: input, shape index: {}]
  %s5 = inlined_call_operand.vmem [shape: bf16[256,8], index: 5, kind: input, shape index: {}]
  %s6 = inlined_call_operand.vmem [shape: f32[1,8], index: 6, kind: input, shape index: {}]
  %s7 = inlined_call_operand.vmem [shape: f32[8,8], index: 7, kind: output, shape index: {}]
  %s8 = sld [smem:[#allocation0]]
  $region42: #{actor_forward.1} parent=0
    _
  %s10 = ssub.s32 1, %s8
  %s11 = scalar_select 0, %s10, %s8
  $region1: #{actor_forward.1} parent=0
    #allocation2 [shape = 'u8[131072]{0}', space=vmem, size = 0x20000, scoped, tag = 'input window, operand 3, single buffered']
    #allocation3 [shape = 's32[1]{0}', space=sflag, size = 0x4, scoped, tag = 'scoped memory for actor_forward.1']
    %12 = vsyncpa [#allocation3], 0
    // Predicated region
    $region2: #{actor_forward.1} parent=1 // pred_check
      _
    $region3: #{actor_forward.1} parent=1 // pred_check_branch
      %14 = sbr.rel (0) target = $region5
    $region4: #{actor_forward.1} parent=1 // pred_region
      _
    $region5: #{actor_forward.1} parent=1 // pred_fallthru
      _
    // Predicated region
    $region6: #{actor_forward.1} parent=1 // pred_check
      _
    $region7: #{actor_forward.1} parent=1 // pred_check_branch
      %16 = sbr.rel (0) target = $region9
    $region8: #{actor_forward.1} parent=1 // pred_region
      _
    $region9: #{actor_forward.1} parent=1 // pred_fallthru
      _
    // Predicated region
    $region10: #{actor_forward.1} parent=1 // pred_check
      _
    $region11: #{actor_forward.1} parent=1 // pred_check_branch
      %18 = sbr.rel (0) target = $region13
    $region12: #{actor_forward.1} parent=1 // pred_region
      _
    $region13: #{actor_forward.1} parent=1 // pred_fallthru
      _
    // Predicated region
    $region14: #{actor_forward.1} parent=1 // pred_check
      _
    $region15: #{actor_forward.1} parent=1 // pred_check_branch
      %20 = sbr.rel (0) target = $region17
    $region16: #{actor_forward.1} parent=1 // pred_region
      %s22 = ssub.s32 4096, 4096
      %23 = vsyncadd [#allocation3], %s22
      %s24 = sshll.u32 [#allocation2], 4
      %s25 = int_to_ptr.vmem [resolvable:$true] %s24
      %30 = dma.hbm_to_vmem [thread:$0]  %s3, 4096, %s25, [#allocation3], 128, 128, 8
    $region17: #{actor_forward.1} parent=1 // pred_fallthru
      _
    // Predicated region
    $region18: #{actor_forward.1} parent=1 // pred_check
      _
    $region19: #{actor_forward.1} parent=1 // pred_check_branch
      %32 = sbr.rel (0) target = $region21
    $region20: #{actor_forward.1} parent=1 // pred_region
      _
    $region21: #{actor_forward.1} parent=1 // pred_fallthru
      _
    // Predicated region
    $region22: #{actor_forward.1} parent=1 // pred_check
      _
    $region23: #{actor_forward.1} parent=1 // pred_check_branch
      %34 = sbr.rel (0) target = $region25
    $region24: #{actor_forward.1} parent=1 // pred_region
      _
    $region25: #{actor_forward.1} parent=1 // pred_fallthru
      _
    // Predicated region
    $region26: #{actor_forward.1} parent=1 // pred_check
      _
    $region27: #{actor_forward.1} parent=1 // pred_check_branch
      %36 = sbr.rel (0) target = $region29
    $region28: #{actor_forward.1} parent=1 // pred_region
      _
    $region29: #{actor_forward.1} parent=1 // pred_fallthru
      _
    // Predicated region
    $region30: #{actor_forward.1} parent=1 // pred_check
      _
    $region31: #{actor_forward.1} parent=1 // pred_check_branch
      %38 = sbr.rel (0) target = $region33
    $region32: #{actor_forward.1} parent=1 // pred_region
      %39 = dma.done [#allocation3], 4096
    $region33: #{actor_forward.1} parent=1 // pred_fallthru
      _
    %v41 = vld [vmem:[%s0] sm:$0xff]
    %v42 = vpack.c.bf16 %v41, %v41
    %v43 = vld [vmem:[%s1] sm:$0xff]
    %v44 = vld [vmem:[%s1 + $0x8] sm:$0xff]
    %v45 = vld [vmem:[%s1 + $0x10] sm:$0xff]
    %v46 = vld [vmem:[%s1 + $0x18] sm:$0xff]
    %v47 = vld [vmem:[%s2] sm:$0x3]
    %v49 = vlaneseq
    %v50 = vshrl.u32 %v49, 7
    %v51 = vsub.s32 0, %v50
    %v52 = vrot.slane %v47, %v51
    %v53 = vlaneseq
    %v54 = vshrl.u32 %v53, 7
    %v55 = vsub.s32 1, %v54
    %v56 = vrot.slane %v47, %v55
    %v63 = vunpack.c.l.b16 %v43
    %v64 = vunpack.c.h.b16 %v43
    %v65 = vunpack.c.l.b16 %v44
    %v66 = vunpack.c.h.b16 %v44
    %v67 = vunpack.c.l.b16 %v45
    %v68 = vunpack.c.h.b16 %v45
    %v69 = vunpack.c.l.b16 %v46
    %v70 = vunpack.c.h.b16 %v46
    %v71 = vpack.c.b16 %v65, %v63
    %v72 = vpack.c.b16 %v66, %v64
    %v73 = vpack.c.b16 %v69, %v67
    %v74 = vpack.c.b16 %v70, %v68
    %vm79 = vcmask 261120
    %v81 = vsel %vm79, %v42, 0
    %83 = vmatprep.subr.bf16.mxu0 0
    %84 = vmatpush1.bf16.msra.mxu0 0
    %85 = vmatprep.subr.bf16.mxu0 0
    %86 = vmatpush1.bf16.msra.mxu0 0
    %87 = vmatprep.subr.bf16.mxu0 0
    %88 = vmatpush1.bf16.msra.mxu0 0
    %89 = vmatprep.subr.bf16.mxu0 0
    %90 = vmatpush1.bf16.msra.mxu0 0
    %91 = vmatprep.subr.bf16.mxu0 0
    %92 = vmatpush1.bf16.msra.mxu0 0
    %93 = vmatprep.subr.bf16.mxu0 0
    %94 = vmatpush1.bf16.msra.mxu0 0
    %95 = vmatprep.subr.bf16.mxu0 %v74
    %96 = vmatpush1.bf16.msra.mxu0 %v73
    %97 = vmatprep.subr.bf16.mxu0 %v72
    %98 = vmatpush1.bf16.msra.mxu0 %v71
    %99 = vmatprep.subr.bf16.mxu0 0
    %100 = vmatpush2.bf16.msra.mxu0 0
    %101 = vmatprep.subr.bf16.mxu0 0
    %102 = vmatpush2.bf16.msra.mxu0 0
    %103 = vmatprep.subr.bf16.mxu0 0
    %104 = vmatpush2.bf16.msra.mxu0 0
    %105 = vmatprep.subr.bf16.mxu0 0
    %106 = vmatpush2.bf16.msra.mxu0 0
    %107 = vmatprep.subr.bf16.mxu0 0
    %108 = vmatpush2.bf16.msra.mxu0 0
    %109 = vmatprep.subr.bf16.mxu0 0
    %110 = vmatpush2.bf16.msra.mxu0 0
    %111 = vmatprep.subr.bf16.mxu0 0
    %112 = vmatpush2.bf16.msra.mxu0 0
    %113 = vmatprep.subr.bf16.mxu0 0
    %114 = vmatpush2.bf16.msra.mxu0 0
    %115 = vmatprep.mubr.bf16.mxu0 0
    %116 = vmatmul.mubr.bf16.gmra.mxu0 %v81
    %v117 = vpop.f32.mrf.mxu0
    %v118 = vadd.f32 %v52, %v117
    %v119 = vpop.f32.mrf.mxu0
    %v120 = vadd.f32 %v56, %v119
    %v121 = vpop.f32.mrf.mxu0
    %v122 = vpop.f32.mrf.mxu0
    %123 = vdwg.mxu0
    %v124 = vmax.f32 %v118, 0.0
    %v125 = vmax.f32 %v120, 0.0
    %v126 = vpack.c.bf16 %v124, %v124
    %v127 = vpack.c.bf16 %v125, %v125
    %v128 = vld [vmem:[#allocation2] sm:$0xff]
    %v129 = vld [vmem:[#allocation2 + $0x8] sm:$0xff]
    %v130 = vld [vmem:[#allocation2 + $0x10] sm:$0xff]
    %v131 = vld [vmem:[#allocation2 + $0x18] sm:$0xff]
    %v132 = vld [vmem:[#allocation2 + $0x20] sm:$0xff]
    %v133 = vld [vmem:[#allocation2 + $0x28] sm:$0xff]
    %v134 = vld [vmem:[#allocation2 + $0x30] sm:$0xff]
    %v135 = vld [vmem:[#allocation2 + $0x38] sm:$0xff]
    %v136 = vld [vmem:[#allocation2 + $0x40] sm:$0xff]
    %v137 = vld [vmem:[#allocation2 + $0x48] sm:$0xff]
    %v138 = vld [vmem:[#allocation2 + $0x50] sm:$0xff]
    %v139 = vld [vmem:[#allocation2 + $0x58] sm:$0xff]
    %v140 = vld [vmem:[#allocation2 + $0x60] sm:$0xff]
    %v141 = vld [vmem:[#allocation2 + $0x68] sm:$0xff]
    %v142 = vld [vmem:[#allocation2 + $0x70] sm:$0xff]
    %v143 = vld [vmem:[#allocation2 + $0x78] sm:$0xff]
    %v144 = vld [vmem:[#allocation2 + $0x80] sm:$0xff]
    %v145 = vld [vmem:[#allocation2 + $0x88] sm:$0xff]
    %v146 = vld [vmem:[#allocation2 + $0x90] sm:$0xff]
    %v147 = vld [vmem:[#allocation2 + $0x98] sm:$0xff]
    %v148 = vld [vmem:[#allocation2 + $0xa0] sm:$0xff]
    %v149 = vld [vmem:[#allocation2 + $0xa8] sm:$0xff]
    %v150 = vld [vmem:[#allocation2 + $0xb0] sm:$0xff]
    %v151 = vld [vmem:[#allocation2 + $0xb8] sm:$0xff]
    %v152 = vld [vmem:[#allocation2 + $0xc0] sm:$0xff]
    %v153 = vld [vmem:[#allocation2 + $0xc8] sm:$0xff]
    %v154 = vld [vmem:[#allocation2 + $0xd0] sm:$0xff]
    %v155 = vld [vmem:[#allocation2 + $0xd8] sm:$0xff]
    %v156 = vld [vmem:[#allocation2 + $0xe0] sm:$0xff]
    %v157 = vld [vmem:[#allocation2 + $0xe8] sm:$0xff]
    %v158 = vld [vmem:[#allocation2 + $0xf0] sm:$0xff]
    %v159 = vld [vmem:[#allocation2 + $0xf8] sm:$0xff]
    %v160 = vld [vmem:[%s4] sm:$0x3]
    %v162 = vlaneseq
    %v163 = vshrl.u32 %v162, 7
    %v164 = vsub.s32 0, %v163
    %v165 = vrot.slane %v160, %v164
    %v166 = vlaneseq
    %v167 = vshrl.u32 %v166, 7
    %v168 = vsub.s32 1, %v167
    %v169 = vrot.slane %v160, %v168
    %v204 = vunpack.c.l.b16 %v128
    %v205 = vunpack.c.h.b16 %v128
    %v206 = vunpack.c.l.b16 %v129
    %v207 = vunpack.c.h.b16 %v129
    %v208 = vunpack.c.l.b16 %v130
    %v209 = vunpack.c.h.b16 %v130
    %v210 = vunpack.c.l.b16 %v131
    %v211 = vunpack.c.h.b16 %v131
    %v212 = vunpack.c.l.b16 %v132
    %v213 = vunpack.c.h.b16 %v132
    %v214 = vunpack.c.l.b16 %v133
    %v215 = vunpack.c.h.b16 %v133
    %v216 = vunpack.c.l.b16 %v134
    %v217 = vunpack.c.h.b16 %v134
    %v218 = vunpack.c.l.b16 %v135
    %v219 = vunpack.c.h.b16 %v135
    %v220 = vunpack.c.l.b16 %v136
    %v221 = vunpack.c.h.b16 %v136
    %v222 = vunpack.c.l.b16 %v137
    %v223 = vunpack.c.h.b16 %v137
    %v224 = vunpack.c.l.b16 %v138
    %v225 = vunpack.c.h.b16 %v138
    %v226 = vunpack.c.l.b16 %v139
    %v227 = vunpack.c.h.b16 %v139
    %v228 = vunpack.c.l.b16 %v140
    %v229 = vunpack.c.h.b16 %v140
    %v230 = vunpack.c.l.b16 %v141
    %v231 = vunpack.c.h.b16 %v141
    %v232 = vunpack.c.l.b16 %v142
    %v233 = vunpack.c.h.b16 %v142
    %v234 = vunpack.c.l.b16 %v143
    %v235 = vunpack.c.h.b16 %v143
    %v236 = vunpack.c.l.b16 %v144
    %v237 = vunpack.c.h.b16 %v144
    %v238 = vunpack.c.l.b16 %v145
    %v239 = vunpack.c.h.b16 %v145
    %v240 = vunpack.c.l.b16 %v146
    %v241 = vunpack.c.h.b16 %v146
    %v242 = vunpack.c.l.b16 %v147
    %v243 = vunpack.c.h.b16 %v147
    %v244 = vunpack.c.l.b16 %v148
    %v245 = vunpack.c.h.b16 %v148
    %v246 = vunpack.c.l.b16 %v149
    %v247 = vunpack.c.h.b16 %v149
    %v248 = vunpack.c.l.b16 %v150
    %v249 = vunpack.c.h.b16 %v150
    %v250 = vunpack.c.l.b16 %v151
    %v251 = vunpack.c.h.b16 %v151
    %v252 = vunpack.c.l.b16 %v152
    %v253 = vunpack.c.h.b16 %v152
    %v254 = vunpack.c.l.b16 %v153
    %v255 = vunpack.c.h.b16 %v153
    %v256 = vunpack.c.l.b16 %v154
    %v257 = vunpack.c.h.b16 %v154
    %v258 = vunpack.c.l.b16 %v155
    %v259 = vunpack.c.h.b16 %v155
    %v260 = vunpack.c.l.b16 %v156
    %v261 = vunpack.c.h.b16 %v156
    %v262 = vunpack.c.l.b16 %v157
    %v263 = vunpack.c.h.b16 %v157
    %v264 = vunpack.c.l.b16 %v158
    %v265 = vunpack.c.h.b16 %v158
    %v266 = vunpack.c.l.b16 %v159
    %v267 = vunpack.c.h.b16 %v159
    %v268 = vpack.c.b16 %v206, %v204
    %v269 = vpack.c.b16 %v207, %v205
    %v270 = vpack.c.b16 %v210, %v208
    %v271 = vpack.c.b16 %v211, %v209
    %v272 = vpack.c.b16 %v214, %v212
    %v273 = vpack.c.b16 %v215, %v213
    %v274 = vpack.c.b16 %v218, %v216
    %v275 = vpack.c.b16 %v219, %v217
    %v276 = vpack.c.b16 %v222, %v220
    %v277 = vpack.c.b16 %v223, %v221
    %v278 = vpack.c.b16 %v226, %v224
    %v279 = vpack.c.b16 %v227, %v225
    %v280 = vpack.c.b16 %v230, %v228
    %v281 = vpack.c.b16 %v231, %v229
    %v282 = vpack.c.b16 %v234, %v232
    %v283 = vpack.c.b16 %v235, %v233
    %v284 = vpack.c.b16 %v238, %v236
    %v285 = vpack.c.b16 %v239, %v237
    %v286 = vpack.c.b16 %v242, %v240
    %v287 = vpack.c.b16 %v243, %v241
    %v288 = vpack.c.b16 %v246, %v244
    %v289 = vpack.c.b16 %v247, %v245
    %v290 = vpack.c.b16 %v250, %v248
    %v291 = vpack.c.b16 %v251, %v249
    %v292 = vpack.c.b16 %v254, %v252
    %v293 = vpack.c.b16 %v255, %v253
    %v294 = vpack.c.b16 %v258, %v256
    %v295 = vpack.c.b16 %v259, %v257
    %v296 = vpack.c.b16 %v262, %v260
    %v297 = vpack.c.b16 %v263, %v261
    %v298 = vpack.c.b16 %v266, %v264
    %v299 = vpack.c.b16 %v267, %v265
    %332 = vmatprep.subr.bf16.mxu0 %v283
    %333 = vmatpush1.bf16.msra.mxu0 %v282
    %334 = vmatprep.subr.bf16.mxu0 %v281
    %335 = vmatpush1.bf16.msra.mxu0 %v280
    %336 = vmatprep.subr.bf16.mxu0 %v279
    %337 = vmatpush1.bf16.msra.mxu0 %v278
    %338 = vmatprep.subr.bf16.mxu0 %v277
    %339 = vmatpush1.bf16.msra.mxu0 %v276
    %340 = vmatprep.subr.bf16.mxu0 %v275
    %341 = vmatpush1.bf16.msra.mxu0 %v274
    %342 = vmatprep.subr.bf16.mxu0 %v273
    %343 = vmatpush1.bf16.msra.mxu0 %v272
    %344 = vmatprep.subr.bf16.mxu0 %v271
    %345 = vmatpush1.bf16.msra.mxu0 %v270
    %346 = vmatprep.subr.bf16.mxu0 %v269
    %347 = vmatpush1.bf16.msra.mxu0 %v268
    %348 = vmatprep.subr.bf16.mxu0 %v299
    %349 = vmatpush2.bf16.msra.mxu0 %v298
    %350 = vmatprep.subr.bf16.mxu0 %v297
    %351 = vmatpush2.bf16.msra.mxu0 %v296
    %352 = vmatprep.subr.bf16.mxu0 %v295
    %353 = vmatpush2.bf16.msra.mxu0 %v294
    %354 = vmatprep.subr.bf16.mxu0 %v293
    %355 = vmatpush2.bf16.msra.mxu0 %v292
    %356 = vmatprep.subr.bf16.mxu0 %v291
    %357 = vmatpush2.bf16.msra.mxu0 %v290
    %358 = vmatprep.subr.bf16.mxu0 %v289
    %359 = vmatpush2.bf16.msra.mxu0 %v288
    %360 = vmatprep.subr.bf16.mxu0 %v287
    %361 = vmatpush2.bf16.msra.mxu0 %v286
    %362 = vmatprep.subr.bf16.mxu0 %v285
    %363 = vmatpush2.bf16.msra.mxu0 %v284
    %364 = vmatprep.mubr.bf16.mxu0 %v127
    %365 = vmatmul.mubr.bf16.gmra.mxu0 %v126
    %v366 = vpop.f32.mrf.mxu0
    %v367 = vadd.f32 %v165, %v366
    %v368 = vpop.f32.mrf.mxu0
    %v369 = vadd.f32 %v169, %v368
    %v370 = vpop.f32.mrf.mxu0
    %v371 = vpop.f32.mrf.mxu0
    %372 = vdwg.mxu0
    %v373 = vmax.f32 %v367, 0.0
    %v374 = vmax.f32 %v369, 0.0
    %v375 = vpack.c.bf16 %v373, %v373
    %v376 = vpack.c.bf16 %v374, %v374
    %v377 = vld [vmem:[%s5] sm:$0xf]
    %v378 = vld [vmem:[%s5 + $0x4] sm:$0xf]
    %v379 = vld [vmem:[%s5 + $0x8] sm:$0xf]
    %v380 = vld [vmem:[%s5 + $0xc] sm:$0xf]
    %v381 = vld [vmem:[%s5 + $0x10] sm:$0xf]
    %v382 = vld [vmem:[%s5 + $0x14] sm:$0xf]
    %v383 = vld [vmem:[%s5 + $0x18] sm:$0xf]
    %v384 = vld [vmem:[%s5 + $0x1c] sm:$0xf]
    %v385 = vld [vmem:[%s5 + $0x20] sm:$0xf]
    %v386 = vld [vmem:[%s5 + $0x24] sm:$0xf]
    %v387 = vld [vmem:[%s5 + $0x28] sm:$0xf]
    %v388 = vld [vmem:[%s5 + $0x2c] sm:$0xf]
    %v389 = vld [vmem:[%s5 + $0x30] sm:$0xf]
    %v390 = vld [vmem:[%s5 + $0x34] sm:$0xf]
    %v391 = vld [vmem:[%s5 + $0x38] sm:$0xf]
    %v392 = vld [vmem:[%s5 + $0x3c] sm:$0xf]
    %v393 = vld [vmem:[%s5 + $0x40] sm:$0xf]
    %v394 = vld [vmem:[%s5 + $0x44] sm:$0xf]
    %v395 = vld [vmem:[%s5 + $0x48] sm:$0xf]
    %v396 = vld [vmem:[%s5 + $0x4c] sm:$0xf]
    %v397 = vld [vmem:[%s5 + $0x50] sm:$0xf]
    %v398 = vld [vmem:[%s5 + $0x54] sm:$0xf]
    %v399 = vld [vmem:[%s5 + $0x58] sm:$0xf]
    %v400 = vld [vmem:[%s5 + $0x5c] sm:$0xf]
    %v401 = vld [vmem:[%s5 + $0x60] sm:$0xf]
    %v402 = vld [vmem:[%s5 + $0x64] sm:$0xf]
    %v403 = vld [vmem:[%s5 + $0x68] sm:$0xf]
    %v404 = vld [vmem:[%s5 + $0x6c] sm:$0xf]
    %v405 = vld [vmem:[%s5 + $0x70] sm:$0xf]
    %v406 = vld [vmem:[%s5 + $0x74] sm:$0xf]
    %v407 = vld [vmem:[%s5 + $0x78] sm:$0xf]
    %v408 = vld [vmem:[%s5 + $0x7c] sm:$0xf]
    %v409 = vld [vmem:[%s6] sm:$0x1]
    %v411 = vlaneseq
    %v412 = vshrl.u32 %v411, 7
    %v413 = vsub.s32 0, %v412
    %v414 = vrot.slane %v409, %v413
    %v448 = vunpack.c.l.b16 %v377
    %v449 = vunpack.c.l.b16 %v378
    %v450 = vunpack.c.l.b16 %v379
    %v451 = vunpack.c.l.b16 %v380
    %v452 = vunpack.c.l.b16 %v381
    %v453 = vunpack.c.l.b16 %v382
    %v454 = vunpack.c.l.b16 %v383
    %v455 = vunpack.c.l.b16 %v384
    %v456 = vunpack.c.l.b16 %v385
    %v457 = vunpack.c.l.b16 %v386
    %v458 = vunpack.c.l.b16 %v387
    %v459 = vunpack.c.l.b16 %v388
    %v460 = vunpack.c.l.b16 %v389
    %v461 = vunpack.c.l.b16 %v390
    %v462 = vunpack.c.l.b16 %v391
    %v463 = vunpack.c.l.b16 %v392
    %v464 = vunpack.c.l.b16 %v393
    %v465 = vunpack.c.l.b16 %v394
    %v466 = vunpack.c.l.b16 %v395
    %v467 = vunpack.c.l.b16 %v396
    %v468 = vunpack.c.l.b16 %v397
    %v469 = vunpack.c.l.b16 %v398
    %v470 = vunpack.c.l.b16 %v399
    %v471 = vunpack.c.l.b16 %v400
    %v472 = vunpack.c.l.b16 %v401
    %v473 = vunpack.c.l.b16 %v402
    %v474 = vunpack.c.l.b16 %v403
    %v475 = vunpack.c.l.b16 %v404
    %v476 = vunpack.c.l.b16 %v405
    %v477 = vunpack.c.l.b16 %v406
    %v478 = vunpack.c.l.b16 %v407
    %v479 = vunpack.c.l.b16 %v408
    %v480 = vpack.c.b16 %v449, %v448
    %v481 = vpack.c.b16 %v451, %v450
    %v482 = vpack.c.b16 %v453, %v452
    %v483 = vpack.c.b16 %v455, %v454
    %v484 = vpack.c.b16 %v457, %v456
    %v485 = vpack.c.b16 %v459, %v458
    %v486 = vpack.c.b16 %v461, %v460
    %v487 = vpack.c.b16 %v463, %v462
    %v488 = vpack.c.b16 %v465, %v464
    %v489 = vpack.c.b16 %v467, %v466
    %v490 = vpack.c.b16 %v469, %v468
    %v491 = vpack.c.b16 %v471, %v470
    %v492 = vpack.c.b16 %v473, %v472
    %v493 = vpack.c.b16 %v475, %v474
    %v494 = vpack.c.b16 %v477, %v476
    %v495 = vpack.c.b16 %v479, %v478
    %512 = vmatprep.subr.bf16.mxu0 0
    %513 = vmatpush1.bf16.msra.mxu0 %v487
    %514 = vmatprep.subr.bf16.mxu0 0
    %515 = vmatpush1.bf16.msra.mxu0 %v486
    %516 = vmatprep.subr.bf16.mxu0 0
    %517 = vmatpush1.bf16.msra.mxu0 %v485
    %518 = vmatprep.subr.bf16.mxu0 0
    %519 = vmatpush1.bf16.msra.mxu0 %v484
    %520 = vmatprep.subr.bf16.mxu0 0
    %521 = vmatpush1.bf16.msra.mxu0 %v483
    %522 = vmatprep.subr.bf16.mxu0 0
    %523 = vmatpush1.bf16.msra.mxu0 %v482
    %524 = vmatprep.subr.bf16.mxu0 0
    %525 = vmatpush1.bf16.msra.mxu0 %v481
    %526 = vmatprep.subr.bf16.mxu0 0
    %527 = vmatpush1.bf16.msra.mxu0 %v480
    %528 = vmatprep.subr.bf16.mxu0 0
    %529 = vmatpush2.bf16.msra.mxu0 %v495
    %530 = vmatprep.subr.bf16.mxu0 0
    %531 = vmatpush2.bf16.msra.mxu0 %v494
    %532 = vmatprep.subr.bf16.mxu0 0
    %533 = vmatpush2.bf16.msra.mxu0 %v493
    %534 = vmatprep.subr.bf16.mxu0 0
    %535 = vmatpush2.bf16.msra.mxu0 %v492
    %536 = vmatprep.subr.bf16.mxu0 0
    %537 = vmatpush2.bf16.msra.mxu0 %v491
    %538 = vmatprep.subr.bf16.mxu0 0
    %539 = vmatpush2.bf16.msra.mxu0 %v490
    %540 = vmatprep.subr.bf16.mxu0 0
    %541 = vmatpush2.bf16.msra.mxu0 %v489
    %542 = vmatprep.subr.bf16.mxu0 0
    %543 = vmatpush2.bf16.msra.mxu0 %v488
    %544 = vmatprep.mubr.bf16.mxu0 %v376
    %545 = vmatmul.mubr.bf16.gmra.mxu0 %v375
    %v546 = vpop.f32.mrf.mxu0
    %v547 = vadd.f32 %v414, %v546
    %v548 = vpop.f32.mrf.mxu0
    %v549 = vpop.f32.mrf.mxu0
    %v550 = vpop.f32.mrf.mxu0
    %551 = vdwg.mxu0
    %v552 = vlaneseq
    %v553 = vand.u32 %v552, 127
    %v554 = vtanh.pop %v547
    %v555 = vmul.f32 %v554, 3.5
    %v556 = vadd.f32 %v555, -1.5
    %vm557 = vcmp.ge.s32.totalorder %v553, 4
    %v558 = vsel %vm557, %v556, %v547
    %vm559 = vcmask 64512
    %560 = vst.msk [vmem:[%s7] sm:$0xff] %vm559, %v558
    // Predicated region
    $region34: #{actor_forward.1} parent=1 // pred_check
      _
    $region35: #{actor_forward.1} parent=1 // pred_check_branch
      %562 = sbr.rel (0) target = $region37
    $region36: #{actor_forward.1} parent=1 // pred_region
      _
    $region37: #{actor_forward.1} parent=1 // pred_fallthru
      _
    // Predicated region
    $region38: #{actor_forward.1} parent=1 // pred_check
      _
    $region39: #{actor_forward.1} parent=1 // pred_check_branch
      %564 = sbr.rel (0) target = $region41
    $region40: #{actor_forward.1} parent=1 // pred_region
      _
    $region41: #{actor_forward.1} parent=1 // pred_fallthru
      _
    %565 = vsyncpa [#allocation3], 1

</llo_original>
